<compile_context>
chip_gen: v7x
topology: tpu7x:2x2x1
jax: 0.10.0
libtpu: 0.0.40
codegen_flags: <defaults>
</compile_context>

<pallas_src>
import jax
import jax.numpy as jnp
from jax.experimental import pallas as pl
from jax.experimental.pallas import tpu as pltpu


def _round_up(x: int, m: int) -> int:
    return ((x + m - 1) // m) * m


# ----------------------------------------------------------------------------
# Pallas kernel: dense head  ReLU(Linear2(ReLU(Linear1(x))))
# ----------------------------------------------------------------------------
def _head_kernel(x_ref, w1_ref, b1_ref, w2_ref, b2_ref, o_ref):
    # x may arrive as f32 or bf16; cast to bf16 for the MXU (VPU cast, cheap),
    # accumulate both matmuls in f32, do bias + ReLU in f32.
    x = x_ref[...].astype(jnp.bfloat16)
    h = jnp.dot(x, w1_ref[...], preferred_element_type=jnp.float32)   # (TB, F_hid_p)
    h = jnp.maximum(h + b1_ref[...], 0.0)
    y = jnp.dot(h.astype(jnp.bfloat16), w2_ref[...],
                preferred_element_type=jnp.float32)                   # (TB, F_out)
    y = jnp.maximum(y + b2_ref[...], 0.0)
    o_ref[...] = y.astype(o_ref.dtype)


# ----------------------------------------------------------------------------
# One-time parameter prep (hoisted out of the per-call path):
#   - weights stored pre-transposed as (in, out) vs. torch Linear.weight
#   - hidden dim zero-padded to a 128 multiple (exact: ReLU(0)=0 and the
#     matching padded W2 rows are zero)
#   - weights in bf16 (MXU operands), biases in f32 (f32 epilogue)
# ----------------------------------------------------------------------------
def prepare_head_params(w1, b1, w2, b2):
    f_in, f_hid = w1.shape
    f_out = w2.shape[1]
    f_hid_p = _round_up(f_hid, 128)

    w1_p = jnp.zeros((f_in, f_hid_p), jnp.bfloat16)
    w1_p = w1_p.at[:, :f_hid].set(w1.astype(jnp.bfloat16))
    b1_p = jnp.zeros((1, f_hid_p), jnp.float32)
    b1_p = b1_p.at[:, :f_hid].set(jnp.reshape(b1, (1, f_hid)).astype(jnp.float32))
    w2_p = jnp.zeros((f_hid_p, f_out), jnp.bfloat16)
    w2_p = w2_p.at[:f_hid, :].set(w2.astype(jnp.bfloat16))
    b2_p = jnp.reshape(b2, (1, f_out)).astype(jnp.float32)
    return w1_p, b1_p, w2_p, b2_p


def metric_learn_head(pooler_output, w1_p, b1_p, w2_p, b2_p,
                      *, batch_tile=2048, out_dtype=jnp.bfloat16):
    """Apply the MetricLearnHFWrapper dense head with a Pallas TPU kernel.

    pooler_output: (B, model_out)        f32 or bf16 (cast in-kernel)
    w1_p: (model_out, f_hid_p)           bf16, hidden dim padded to 128-mult
    b1_p: (1, f_hid_p)                   f32
    w2_p: (f_hid_p, embed_out)           bf16
    b2_p: (1, embed_out)                 f32
    """
    B, f_in = pooler_output.shape
    f_hid_p = w1_p.shape[1]
    f_out = w2_p.shape[1]

    # VMEM-aware batch tile: big tiles amortize the ~0.35 us per-grid-step
    # overhead, but keep double-buffered x/out tiles + resident weights under
    # ~24 MiB (safe for v7x's 32 MiB default scoped VMEM).
    x_bytes = jnp.dtype(pooler_output.dtype).itemsize
    o_bytes = jnp.dtype(out_dtype).itemsize
    w_bytes = 2 * (f_in * f_hid_p + f_hid_p * f_out)          # bf16 weights
    bt = max(16, _round_up(batch_tile, 16))
    budget = 24 * 1024 * 1024
    while bt > 16 and 2 * bt * (f_in * x_bytes + f_out * o_bytes) + w_bytes > budget:
        bt //= 2
    # Single full-extent block for small batches (always a legal block shape);
    # otherwise a multiple-of-16 tile with a masked partial last block.
    tb = B if B <= bt else bt
    grid = (pl.cdiv(B, tb),)

    flops = 2 * B * (f_in * f_hid_p + f_hid_p * f_out)
    bytes_accessed = (
        B * f_in * x_bytes            # activations in
        + f_in * f_hid_p * 2          # w1 (bf16)
        + f_hid_p * 4                 # b1 (f32)
        + f_hid_p * f_out * 2         # w2 (bf16)
        + f_out * 4                   # b2 (f32)
        + B * f_out * o_bytes         # out
    )

    return pl.pallas_call(
        _head_kernel,
        out_shape=jax.ShapeDtypeStruct((B, f_out), out_dtype),
        grid_spec=pltpu.PrefetchScalarGridSpec(
            num_scalar_prefetch=0,
            grid=grid,
            in_specs=[
                # activations: tile over batch, full feature dim per block
                pl.BlockSpec((tb, f_in), lambda i: (i, 0)),
                # weights / biases: full arrays, same block every grid step
                pl.BlockSpec((f_in, f_hid_p), lambda i: (0, 0)),
                pl.BlockSpec((1, f_hid_p), lambda i: (0, 0)),
                pl.BlockSpec((f_hid_p, f_out), lambda i: (0, 0)),
                pl.BlockSpec((1, f_out), lambda i: (0, 0)),
            ],
            out_specs=pl.BlockSpec((tb, f_out), lambda i: (i, 0)),
        ),
        compiler_params=pltpu.CompilerParams(
            dimension_semantics=("parallel",),   # batch tiles shard across TCs
        ),
        cost_estimate=pl.CostEstimate(
            flops=flops, transcendentals=0, bytes_accessed=bytes_accessed),
    )(pooler_output, w1_p, b1_p, w2_p, b2_p)


# ----------------------------------------------------------------------------
# Deterministic parameter init (mimics torch.nn.Linear default: U(-k, k),
# k = 1/sqrt(in_features)), stored pre-transposed as (in, out).
# ----------------------------------------------------------------------------
def init_head_params(key, model_out_size=128, embed_out_size=128):
    hid = model_out_size // 2
    k1, k2, k3, k4 = jax.random.split(key, 4)
    lim1 = 1.0 / jnp.sqrt(model_out_size)
    lim2 = 1.0 / jnp.sqrt(hid)
    w1 = jax.random.uniform(k1, (model_out_size, hid), jnp.float32, -lim1, lim1)
    b1 = jax.random.uniform(k2, (1, hid), jnp.float32, -lim1, lim1)
    w2 = jax.random.uniform(k3, (hid, embed_out_size), jnp.float32, -lim2, lim2)
    b2 = jax.random.uniform(k4, (1, embed_out_size), jnp.float32, -lim2, lim2)
    return w1, b1, w2, b2


if __name__ == "__main__":
    key = jax.random.PRNGKey(0)
    kx, km, kt, kp, kenc = jax.random.split(key, 5)

    # Small, module-consistent shapes.
    B = 8                 # batch
    S = 16                # sequence length (encoder input)
    V = 64                # toy vocab size
    MODEL_OUT = 128       # model_out_size
    EMBED_OUT = 128       # embed_out_size

    # Encoder-style inputs (token ids, attention mask, token type ids).
    x = jax.random.randint(kx, (B, S), 0, V, dtype=jnp.int32)
    attention_mask = jnp.ones((B, S), dtype=jnp.int32)
    token_type_ids = jnp.zeros((B, S), dtype=jnp.int32)

    # TODO(synk): self.encoder is an arbitrary HuggingFace model with no Pallas
    # translation; a deterministic stand-in (embedding lookup + masked mean
    # pool) produces a (B, MODEL_OUT) pooler_output in plain JAX.
    embed_table = jax.random.normal(kenc, (V, MODEL_OUT), jnp.float32) * 0.02
    tok_emb = embed_table[x]                                   # (B, S, MODEL_OUT)
    mask = attention_mask[:, :, None].astype(jnp.float32)
    pooler_output = (tok_emb * mask).sum(axis=1) / jnp.maximum(mask.sum(axis=1), 1.0)

    # Dense head params; pad/cast ONCE at init (hoisted out of the call path).
    w1, b1, w2, b2 = init_head_params(kp, MODEL_OUT, EMBED_OUT)
    w1_p, b1_p, w2_p, b2_p = prepare_head_params(w1, b1, w2, b2)

    # Pallas kernel: ReLU(dense_2(ReLU(dense_1(pooler_output))))
    out = metric_learn_head(pooler_output, w1_p, b1_p, w2_p, b2_p)
    out = jax.block_until_ready(out)
    assert out.shape == (B, EMBED_OUT)
    out_f32 = out.astype(jnp.float32)

    # Reference 1: bf16-consistent reference (same precision recipe as kernel).
    ref16 = jnp.maximum(
        jnp.dot(pooler_output.astype(jnp.bfloat16), w1.astype(jnp.bfloat16),
                preferred_element_type=jnp.float32) + b1, 0.0)
    ref16 = jnp.maximum(
        jnp.dot(ref16.astype(jnp.bfloat16), w2.astype(jnp.bfloat16),
                preferred_element_type=jnp.float32) + b2, 0.0)
    assert jnp.allclose(out_f32, ref16, atol=1e-2, rtol=1e-2)

    # Reference 2: full f32 reference (loose tolerance for bf16 operands/output).
    ref32 = jnp.maximum(pooler_output @ w1 + b1, 0.0)
    ref32 = jnp.maximum(ref32 @ w2 + b2, 0.0)
    assert jnp.allclose(out_f32, ref32, atol=5e-2, rtol=5e-2)

    print("KERNEL_OK")
</pallas_src>

<mosaic_0001>
module attributes {stable_mosaic.version = 11 : i64} {
  func.func @_head_kernel(%arg0: i32, %arg1: memref<8x128xf32, #tpu.memory_space<vmem>>, %arg2: memref<128x128xbf16, #tpu.memory_space<vmem>>, %arg3: memref<1x128xf32, #tpu.memory_space<vmem>>, %arg4: memref<128x128xbf16, #tpu.memory_space<vmem>>, %arg5: memref<1x128xf32, #tpu.memory_space<vmem>>, %arg6: memref<8x128xbf16, #tpu.memory_space<vmem>>) attributes {dimension_semantics = [#tpu.dimension_semantics<parallel>], iteration_bounds = array<i64: 1>, scalar_prefetch = 0 : i64, scratch_operands = 0 : i64, tpu.core_type = #tpu.core_type<tc>, window_params = [{transform_indices = @transform_0, window_bounds = array<i64: 8, 128>}, {pipeline_mode = #tpu.pipeline_mode<synchronous>, transform_indices = @transform_1, window_bounds = array<i64: 128, 128>}, {pipeline_mode = #tpu.pipeline_mode<synchronous>, transform_indices = @transform_2, window_bounds = array<i64: 1, 128>}, {pipeline_mode = #tpu.pipeline_mode<synchronous>, transform_indices = @transform_3, window_bounds = array<i64: 128, 128>}, {pipeline_mode = #tpu.pipeline_mode<synchronous>, transform_indices = @transform_4, window_bounds = array<i64: 1, 128>}, {transform_indices = @transform_5, window_bounds = array<i64: 8, 128>}]} {
    %c0 = arith.constant 0 : index
    %c0_0 = arith.constant 0 : index
    %0 = vector.load %arg1[%c0, %c0_0] : memref<8x128xf32, #tpu.memory_space<vmem>>, vector<8x128xf32>
    %1 = arith.truncf %0 : vector<8x128xf32> to vector<8x128xbf16>
    %c0_1 = arith.constant 0 : index
    %c0_2 = arith.constant 0 : index
    %2 = vector.load %arg2[%c0_1, %c0_2] : memref<128x128xbf16, #tpu.memory_space<vmem>>, vector<128x128xbf16>
    %cst = arith.constant dense<0.000000e+00> : vector<8x128xf32>
    %3 = tpu.matmul %1, %2, %cst {dimension_numbers = #tpu.dot_dimension_numbers<[1], [0], [0], [1], [0, 0, 1, 1], [], []>} : vector<8x128xbf16>, vector<128x128xbf16>, vector<8x128xf32> -> vector<8x128xf32>
    %c0_3 = arith.constant 0 : index
    %c0_4 = arith.constant 0 : index
    %4 = vector.load %arg3[%c0_3, %c0_4] : memref<1x128xf32, #tpu.memory_space<vmem>>, vector<1x128xf32>
    %5 = vector.broadcast %4 : vector<1x128xf32> to vector<8x128xf32>
    %6 = arith.addf %3, %5 : vector<8x128xf32>
    %cst_5 = arith.constant 0.000000e+00 : f32
    %7 = vector.broadcast %cst_5 : f32 to vector<8x128xf32>
    %8 = arith.maximumf %6, %7 : vector<8x128xf32>
    %9 = arith.truncf %8 : vector<8x128xf32> to vector<8x128xbf16>
    %c0_6 = arith.constant 0 : index
    %c0_7 = arith.constant 0 : index
    %10 = vector.load %arg4[%c0_6, %c0_7] : memref<128x128xbf16, #tpu.memory_space<vmem>>, vector<128x128xbf16>
    %cst_8 = arith.constant dense<0.000000e+00> : vector<8x128xf32>
    %11 = tpu.matmul %9, %10, %cst_8 {dimension_numbers = #tpu.dot_dimension_numbers<[1], [0], [0], [1], [0, 0, 1, 1], [], []>} : vector<8x128xbf16>, vector<128x128xbf16>, vector<8x128xf32> -> vector<8x128xf32>
    %c0_9 = arith.constant 0 : index
    %c0_10 = arith.constant 0 : index
    %12 = vector.load %arg5[%c0_9, %c0_10] : memref<1x128xf32, #tpu.memory_space<vmem>>, vector<1x128xf32>
    %13 = vector.broadcast %12 : vector<1x128xf32> to vector<8x128xf32>
    %14 = arith.addf %11, %13 : vector<8x128xf32>
    %cst_11 = arith.constant 0.000000e+00 : f32
    %15 = vector.broadcast %cst_11 : f32 to vector<8x128xf32>
    %16 = arith.maximumf %14, %15 : vector<8x128xf32>
    %17 = arith.truncf %16 : vector<8x128xf32> to vector<8x128xbf16>
    %c0_12 = arith.constant 0 : index
    %c0_13 = arith.constant 0 : index
    %18 = vector.load %arg6[%c0_12, %c0_13] : memref<8x128xbf16, #tpu.memory_space<vmem>>, vector<8x128xbf16>
    tpu.vector_store %arg6[%c0_12, %c0_13], %17 {strides = array<i32>} : memref<8x128xbf16, #tpu.memory_space<vmem>>, vector<8x128xbf16>,
    return
  }
  func.func @transform_0(%arg0: i32) -> (i32, i32) {
    %c0_i32 = arith.constant 0 : i32
    %c0_i32_0 = arith.constant 0 : i32
    return %arg0, %c0_i32 : i32, i32
  }
  func.func @transform_1(%arg0: i32) -> (i32, i32) {
    %c0_i32 = arith.constant 0 : i32
    %c0_i32_0 = arith.constant 0 : i32
    %c0_i32_1 = arith.constant 0 : i32
    return %c0_i32, %c0_i32_0 : i32, i32
  }
  func.func @transform_2(%arg0: i32) -> (i32, i32) {
    %c0_i32 = arith.constant 0 : i32
    %c0_i32_0 = arith.constant 0 : i32
    %c0_i32_1 = arith.constant 0 : i32
    return %c0_i32, %c0_i32_0 : i32, i32
  }
  func.func @transform_3(%arg0: i32) -> (i32, i32) {
    %c0_i32 = arith.constant 0 : i32
    %c0_i32_0 = arith.constant 0 : i32
    %c0_i32_1 = arith.constant 0 : i32
    return %c0_i32, %c0_i32_0 : i32, i32
  }
  func.func @transform_4(%arg0: i32) -> (i32, i32) {
    %c0_i32 = arith.constant 0 : i32
    %c0_i32_0 = arith.constant 0 : i32
    %c0_i32_1 = arith.constant 0 : i32
    return %c0_i32, %c0_i32_0 : i32, i32
  }
  func.func @transform_5(%arg0: i32) -> (i32, i32) {
    %c0_i32 = arith.constant 0 : i32
    %c0_i32_0 = arith.constant 0 : i32
    return %arg0, %c0_i32 : i32, i32
  }
}

</mosaic_0001>

<llo_original>
// kernel: tpu_custom_call.1
$region0: #{tpu_custom_call.1}
  #allocation0 [shape = 'u32[]', space=smem, size = 0x4, offset = 0x4, fixed_abs, tag = 'smem constant byte address 0x4 - core index']
  #allocation1 [shape = 'u32[144,128]{1,0:T(1,128)}', space=vmem, size = 0x12000, scoped, tag = 'internal scratch']
  %s0 = inlined_call_operand.hbm [shape: f32[8,128], index: 0, kind: input, shape index: {}]
  %s1 = inlined_call_operand.hbm [shape: bf16[128,128], index: 1, kind: input, shape index: {}]
  %s2 = inlined_call_operand.vmem [shape: f32[1,128], index: 2, kind: input, shape index: {}]
  %s3 = inlined_call_operand.hbm [shape: bf16[128,128], index: 3, kind: input, shape index: {}]
  %s4 = inlined_call_operand.vmem [shape: f32[1,128], index: 4, kind: input, shape index: {}]
  %s5 = inlined_call_operand.hbm [shape: bf16[8,128], index: 5, kind: output, shape index: {}]
  %s6 = sld [smem:[#allocation0]]
  $region42: #{tpu_custom_call.1} parent=0
    _
  %s8 = ssub.s32 1, %s6
  %s9 = scalar_select 0, %s8, %s6
  $region1: #{tpu_custom_call.1} parent=0
    #allocation2 [shape = 'u8[4096]{0}', space=vmem, size = 0x1000, scoped, tag = 'input window, operand 0, single buffered']
    #allocation3 [shape = 's32[1]{0}', space=sflag, size = 0x4, scoped, tag = 'scoped memory for tpu_custom_call.1']
    #allocation4 [shape = 's32[1]{0}', space=sflag, size = 0x4, scoped, tag = 'scoped memory for tpu_custom_call.1']
    #allocation5 [shape = 'u8[32768]{0}', space=vmem, size = 0x8000, scoped, tag = 'input window, operand 1, single buffered']
    #allocation6 [shape = 's32[1]{0}', space=sflag, size = 0x4, scoped, tag = 'scoped memory for tpu_custom_call.1']
    #allocation7 [shape = 'u8[32768]{0}', space=vmem, size = 0x8000, scoped, tag = 'input window, operand 3, single buffered']
    #allocation8 [shape = 'u8[2048]{0}', space=vmem, size = 0x800, scoped, tag = 'output window, operand 0, single buffered']
    %10 = vsyncpa [#allocation3], 0
    %11 = vsyncpa [#allocation6], 0
    %12 = vsyncpa [#allocation4], 0
    // Predicated region
    $region2: #{tpu_custom_call.1} parent=1 // pred_check
      _
    $region3: #{tpu_custom_call.1} parent=1 // pred_check_branch
      %14 = sbr.rel (0) target = $region5
    $region4: #{tpu_custom_call.1} parent=1 // pred_region
      %s16 = ssub.s32 128, 128
      %17 = vsyncadd [#allocation3], %s16
      %s19 = sshll.u32 [#allocation2], 4
      %s20 = int_to_ptr.vmem [resolvable:$true] %s19
      %22 = dma.hbm_to_vmem [thread:$0]  %s0, 128, %s20, [#allocation3]
    $region5: #{tpu_custom_call.1} parent=1 // pred_fallthru
      _
    // Predicated region
    $region6: #{tpu_custom_call.1} parent=1 // pred_check
      _
    $region7: #{tpu_custom_call.1} parent=1 // pred_check_branch
      %24 = sbr.rel (0) target = $region9
    $region8: #{tpu_custom_call.1} parent=1 // pred_region
      %s26 = ssub.s32 1024, 1024
      %27 = vsyncadd [#allocation6], %s26
      %s28 = sshll.u32 [#allocation5], 4
      %s29 = int_to_ptr.vmem [resolvable:$true] %s28
      %34 = dma.hbm_to_vmem [thread:$0]  %s1, 1024, %s29, [#allocation6], 64, 64, 4
    $region9: #{tpu_custom_call.1} parent=1 // pred_fallthru
      _
    // Predicated region
    $region10: #{tpu_custom_call.1} parent=1 // pred_check
      _
    $region11: #{tpu_custom_call.1} parent=1 // pred_check_branch
      %36 = sbr.rel (0) target = $region13
    $region12: #{tpu_custom_call.1} parent=1 // pred_region
      _
    $region13: #{tpu_custom_call.1} parent=1 // pred_fallthru
      _
    // Predicated region
    $region14: #{tpu_custom_call.1} parent=1 // pred_check
      _
    $region15: #{tpu_custom_call.1} parent=1 // pred_check_branch
      %38 = sbr.rel (0) target = $region17
    $region16: #{tpu_custom_call.1} parent=1 // pred_region
      %s40 = ssub.s32 1024, 1024
      %41 = vsyncadd [#allocation6], %s40
      %s42 = sshll.u32 [#allocation7], 4
      %s43 = int_to_ptr.vmem [resolvable:$true] %s42
      %48 = dma.hbm_to_vmem [thread:$0]  %s3, 1024, %s43, [#allocation6], 64, 64, 4
    $region17: #{tpu_custom_call.1} parent=1 // pred_fallthru
      _
    // Predicated region
    $region18: #{tpu_custom_call.1} parent=1 // pred_check
      _
    $region19: #{tpu_custom_call.1} parent=1 // pred_check_branch
      %50 = sbr.rel (0) target = $region21
    $region20: #{tpu_custom_call.1} parent=1 // pred_region
      _
    $region21: #{tpu_custom_call.1} parent=1 // pred_fallthru
      _
    // Predicated region
    $region22: #{tpu_custom_call.1} parent=1 // pred_check
      _
    $region23: #{tpu_custom_call.1} parent=1 // pred_check_branch
      %52 = sbr.rel (0) target = $region25
    $region24: #{tpu_custom_call.1} parent=1 // pred_region
      %53 = dma.done [#allocation3], 128
    $region25: #{tpu_custom_call.1} parent=1 // pred_fallthru
      _
    // Predicated region
    $region26: #{tpu_custom_call.1} parent=1 // pred_check
      _
    $region27: #{tpu_custom_call.1} parent=1 // pred_check_branch
      %55 = sbr.rel (0) target = $region29
    $region28: #{tpu_custom_call.1} parent=1 // pred_region
      %56 = dma.done [#allocation6], 1024
    $region29: #{tpu_custom_call.1} parent=1 // pred_fallthru
      _
    // Predicated region
    $region30: #{tpu_custom_call.1} parent=1 // pred_check
      _
    $region31: #{tpu_custom_call.1} parent=1 // pred_check_branch
      %58 = sbr.rel (0) target = $region33
    $region32: #{tpu_custom_call.1} parent=1 // pred_region
      %59 = dma.done [#allocation6], 1024
    $region33: #{tpu_custom_call.1} parent=1 // pred_fallthru
      _
    %v61 = vld [vmem:[#allocation2] sm:$0xff]
    %v62 = vpack.c.bf16 %v61, %v61
    %v63 = vld [vmem:[#allocation5] sm:$0xf]
    %v64 = vld [vmem:[#allocation5 + $0x4] sm:$0xf]
    %v65 = vld [vmem:[#allocation5 + $0x8] sm:$0xf]
    %v66 = vld [vmem:[#allocation5 + $0xc] sm:$0xf]
    %v67 = vld [vmem:[#allocation5 + $0x10] sm:$0xf]
    %v68 = vld [vmem:[#allocation5 + $0x14] sm:$0xf]
    %v69 = vld [vmem:[#allocation5 + $0x18] sm:$0xf]
    %v70 = vld [vmem:[#allocation5 + $0x1c] sm:$0xf]
    %v71 = vld [vmem:[#allocation5 + $0x20] sm:$0xf]
    %v72 = vld [vmem:[#allocation5 + $0x24] sm:$0xf]
    %v73 = vld [vmem:[#allocation5 + $0x28] sm:$0xf]
    %v74 = vld [vmem:[#allocation5 + $0x2c] sm:$0xf]
    %v75 = vld [vmem:[#allocation5 + $0x30] sm:$0xf]
    %v76 = vld [vmem:[#allocation5 + $0x34] sm:$0xf]
    %v77 = vld [vmem:[#allocation5 + $0x38] sm:$0xf]
    %v78 = vld [vmem:[#allocation5 + $0x3c] sm:$0xf]
    %v79 = vld [vmem:[%s2] sm:$0x1]
    %v81 = vlaneseq
    %v82 = vshrl.u32 %v81, 7
    %v83 = vsub.s32 0, %v82
    %v84 = vrot.slane %v79, %v83
    %v102 = vunpack.c.l.b16 %v63
    %v103 = vunpack.c.l.b16 %v64
    %v104 = vunpack.c.l.b16 %v65
    %v105 = vunpack.c.l.b16 %v66
    %v106 = vunpack.c.l.b16 %v67
    %v107 = vunpack.c.l.b16 %v68
    %v108 = vunpack.c.l.b16 %v69
    %v109 = vunpack.c.l.b16 %v70
    %v110 = vunpack.c.l.b16 %v71
    %v111 = vunpack.c.l.b16 %v72
    %v112 = vunpack.c.l.b16 %v73
    %v113 = vunpack.c.l.b16 %v74
    %v114 = vunpack.c.l.b16 %v75
    %v115 = vunpack.c.l.b16 %v76
    %v116 = vunpack.c.l.b16 %v77
    %v117 = vunpack.c.l.b16 %v78
    %v118 = vpack.c.b16 %v103, %v102
    %v119 = vpack.c.b16 %v105, %v104
    %v120 = vpack.c.b16 %v107, %v106
    %v121 = vpack.c.b16 %v109, %v108
    %v122 = vpack.c.b16 %v111, %v110
    %v123 = vpack.c.b16 %v113, %v112
    %v124 = vpack.c.b16 %v115, %v114
    %v125 = vpack.c.b16 %v117, %v116
    %134 = vmatprep.subr.bf16.mxu0 0
    %135 = vmatpush1.bf16.msra.mxu0 %v118
    %136 = vmatprep.subr.bf16.mxu0 0
    %137 = vmatpush1.bf16.msra.mxu0 %v119
    %138 = vmatprep.subr.bf16.mxu0 0
    %139 = vmatpush1.bf16.msra.mxu0 %v120
    %140 = vmatprep.subr.bf16.mxu0 0
    %141 = vmatpush1.bf16.msra.mxu0 %v121
    %142 = vmatprep.subr.bf16.mxu0 0
    %143 = vmatpush1.bf16.msra.mxu0 %v122
    %144 = vmatprep.subr.bf16.mxu0 0
    %145 = vmatpush1.bf16.msra.mxu0 %v123
    %146 = vmatprep.subr.bf16.mxu0 0
    %147 = vmatpush1.bf16.msra.mxu0 %v124
    %148 = vmatprep.subr.bf16.mxu0 0
    %149 = vmatpush1.bf16.msra.mxu0 %v125
    %150 = vmatprep.subr.bf16.mxu0 0
    %151 = vmatpush1.bf16.msra.mxu0 0
    %152 = vmatprep.subr.bf16.mxu0 0
    %153 = vmatpush1.bf16.msra.mxu0 0
    %154 = vmatprep.subr.bf16.mxu0 0
    %155 = vmatpush1.bf16.msra.mxu0 0
    %156 = vmatprep.subr.bf16.mxu0 0
    %157 = vmatpush1.bf16.msra.mxu0 0
    %158 = vmatprep.subr.bf16.mxu0 0
    %159 = vmatpush1.bf16.msra.mxu0 0
    %160 = vmatprep.subr.bf16.mxu0 0
    %161 = vmatpush1.bf16.msra.mxu0 0
    %162 = vmatprep.subr.bf16.mxu0 0
    %163 = vmatpush1.bf16.msra.mxu0 0
    %164 = vmatprep.subr.bf16.mxu0 0
    %165 = vmatpush1.bf16.msra.mxu0 0
    %166 = vmatprep.mubr.bf16.mxu0 0
    %167 = vmatmul.mubr.bf16.gmra.mrb[0].mxu0 %v62
    %v168 = vpop.f32.mrb[0].mxu0
    %v169 = vadd.f32 %v84, %v168
    %v170 = vpop.f32.mrb[0].mxu0
    %v171 = vpop.f32.mrb[0].mxu0
    %v172 = vpop.f32.mrb[0].mxu0
    %173 = vdwg.mxu0
    %v174 = vmax.f32 %v169, 0.0
    %v175 = vpack.c.bf16 %v174, %v174
    %v176 = vld [vmem:[#allocation7] sm:$0xf]
    %v177 = vld [vmem:[#allocation7 + $0x4] sm:$0xf]
    %v178 = vld [vmem:[#allocation7 + $0x8] sm:$0xf]
    %v179 = vld [vmem:[#allocation7 + $0xc] sm:$0xf]
    %v180 = vld [vmem:[#allocation7 + $0x10] sm:$0xf]
    %v181 = vld [vmem:[#allocation7 + $0x14] sm:$0xf]
    %v182 = vld [vmem:[#allocation7 + $0x18] sm:$0xf]
    %v183 = vld [vmem:[#allocation7 + $0x1c] sm:$0xf]
    %v184 = vld [vmem:[#allocation7 + $0x20] sm:$0xf]
    %v185 = vld [vmem:[#allocation7 + $0x24] sm:$0xf]
    %v186 = vld [vmem:[#allocation7 + $0x28] sm:$0xf]
    %v187 = vld [vmem:[#allocation7 + $0x2c] sm:$0xf]
    %v188 = vld [vmem:[#allocation7 + $0x30] sm:$0xf]
    %v189 = vld [vmem:[#allocation7 + $0x34] sm:$0xf]
    %v190 = vld [vmem:[#allocation7 + $0x38] sm:$0xf]
    %v191 = vld [vmem:[#allocation7 + $0x3c] sm:$0xf]
    %v192 = vld [vmem:[%s4] sm:$0x1]
    %v194 = vlaneseq
    %v195 = vshrl.u32 %v194, 7
    %v196 = vsub.s32 0, %v195
    %v197 = vrot.slane %v192, %v196
    %v215 = vunpack.c.l.b16 %v176
    %v216 = vunpack.c.l.b16 %v177
    %v217 = vunpack.c.l.b16 %v178
    %v218 = vunpack.c.l.b16 %v179
    %v219 = vunpack.c.l.b16 %v180
    %v220 = vunpack.c.l.b16 %v181
    %v221 = vunpack.c.l.b16 %v182
    %v222 = vunpack.c.l.b16 %v183
    %v223 = vunpack.c.l.b16 %v184
    %v224 = vunpack.c.l.b16 %v185
    %v225 = vunpack.c.l.b16 %v186
    %v226 = vunpack.c.l.b16 %v187
    %v227 = vunpack.c.l.b16 %v188
    %v228 = vunpack.c.l.b16 %v189
    %v229 = vunpack.c.l.b16 %v190
    %v230 = vunpack.c.l.b16 %v191
    %v231 = vpack.c.b16 %v216, %v215
    %v232 = vpack.c.b16 %v218, %v217
    %v233 = vpack.c.b16 %v220, %v219
    %v234 = vpack.c.b16 %v222, %v221
    %v235 = vpack.c.b16 %v224, %v223
    %v236 = vpack.c.b16 %v226, %v225
    %v237 = vpack.c.b16 %v228, %v227
    %v238 = vpack.c.b16 %v230, %v229
    %247 = vmatprep.subr.bf16.mxu0 0
    %248 = vmatpush1.bf16.msra.mxu0 %v231
    %249 = vmatprep.subr.bf16.mxu0 0
    %250 = vmatpush1.bf16.msra.mxu0 %v232
    %251 = vmatprep.subr.bf16.mxu0 0
    %252 = vmatpush1.bf16.msra.mxu0 %v233
    %253 = vmatprep.subr.bf16.mxu0 0
    %254 = vmatpush1.bf16.msra.mxu0 %v234
    %255 = vmatprep.subr.bf16.mxu0 0
    %256 = vmatpush1.bf16.msra.mxu0 %v235
    %257 = vmatprep.subr.bf16.mxu0 0
    %258 = vmatpush1.bf16.msra.mxu0 %v236
    %259 = vmatprep.subr.bf16.mxu0 0
    %260 = vmatpush1.bf16.msra.mxu0 %v237
    %261 = vmatprep.subr.bf16.mxu0 0
    %262 = vmatpush1.bf16.msra.mxu0 %v238
    %263 = vmatprep.subr.bf16.mxu0 0
    %264 = vmatpush1.bf16.msra.mxu0 0
    %265 = vmatprep.subr.bf16.mxu0 0
    %266 = vmatpush1.bf16.msra.mxu0 0
    %267 = vmatprep.subr.bf16.mxu0 0
    %268 = vmatpush1.bf16.msra.mxu0 0
    %269 = vmatprep.subr.bf16.mxu0 0
    %270 = vmatpush1.bf16.msra.mxu0 0
    %271 = vmatprep.subr.bf16.mxu0 0
    %272 = vmatpush1.bf16.msra.mxu0 0
    %273 = vmatprep.subr.bf16.mxu0 0
    %274 = vmatpush1.bf16.msra.mxu0 0
    %275 = vmatprep.subr.bf16.mxu0 0
    %276 = vmatpush1.bf16.msra.mxu0 0
    %277 = vmatprep.subr.bf16.mxu0 0
    %278 = vmatpush1.bf16.msra.mxu0 0
    %279 = vmatprep.mubr.bf16.mxu0 0
    %280 = vmatmul.mubr.bf16.gmra.mrb[0].mxu0 %v175
    %v281 = vpop.f32.mrb[0].mxu0
    %v282 = vadd.f32 %v197, %v281
    %v283 = vpop.f32.mrb[0].mxu0
    %v284 = vpop.f32.mrb[0].mxu0
    %v285 = vpop.f32.mrb[0].mxu0
    %286 = vdwg.mxu0
    %v287 = vmax.f32 %v282, 0.0
    %v288 = vpack.c.bf16 %v287, %v287
    %289 = vst [vmem:[#allocation8] sm:$0xf] %v288
    // Predicated region
    $region34: #{tpu_custom_call.1} parent=1 // pred_check
      _
    $region35: #{tpu_custom_call.1} parent=1 // pred_check_branch
      %291 = sbr.rel (0) target = $region37
    $region36: #{tpu_custom_call.1} parent=1 // pred_region
      %s293 = ssub.s32 64, 64
      %294 = vsyncadd [#allocation4], %s293
      %s296 = sshll.u32 [#allocation8], 4
      %s297 = int_to_ptr.vmem [resolvable:$true] %s296
      %299 = dma.vmem_to_hbm [thread:$0]  %s297, 64, %s5, [#allocation4]
    $region37: #{tpu_custom_call.1} parent=1 // pred_fallthru
      _
    // Predicated region
    $region38: #{tpu_custom_call.1} parent=1 // pred_check
      _
    $region39: #{tpu_custom_call.1} parent=1 // pred_check_branch
      %301 = sbr.rel (0) target = $region41
    $region40: #{tpu_custom_call.1} parent=1 // pred_region
      %302 = dma.done [#allocation4], 64
    $region41: #{tpu_custom_call.1} parent=1 // pred_fallthru
      _
    %303 = vsyncpa [#allocation3], 1
    %304 = vsyncpa [#allocation6], 1
    %305 = vsyncpa [#allocation4], 1

</llo_original>
